<compile_context>
chip_gen: v7x
topology: tpu7x:2x2x1
jax: 0.10.0
libtpu: 0.0.40
codegen_flags: <defaults>
</compile_context>

<pallas_src>
import numpy as np
import jax
import jax.numpy as jnp
from jax import lax
from jax.experimental import pallas as pl
from jax.experimental.pallas import tpu as pltpu

# ----------------------------------------------------------------------------
# cfg.TRAIN constants (standard faster-rcnn.pytorch defaults, small BATCH_SIZE
# for this synthetic test).
# ----------------------------------------------------------------------------
BBOX_NORMALIZE_MEANS = (0.0, 0.0, 0.0, 0.0)
BBOX_NORMALIZE_STDS = (0.1, 0.1, 0.2, 0.2)
BBOX_INSIDE_WEIGHTS = (1.0, 1.0, 1.0, 1.0)
BBOX_NORMALIZE_TARGETS_PRECOMPUTED = True
TRAIN_BATCH_SIZE = 16          # rois_per_image (256 in the original cfg)
TRAIN_FG_FRACTION = 0.25
FG_THRESH = 0.5
BG_THRESH_HI = 0.5
BG_THRESH_LO = 0.0
NUM_CLASSES = 5

# Folded normalization constants: (t - mean) / std == t * (1/std) + (-mean/std)
_INV_STD = tuple(1.0 / s for s in BBOX_NORMALIZE_STDS)
_NEG_MEAN_OVER_STD = tuple(-m / s for m, s in zip(BBOX_NORMALIZE_MEANS, BBOX_NORMALIZE_STDS))


# ----------------------------------------------------------------------------
# Kernel A: IoU overlaps + max / first-occurrence argmax over gt axis + label gather.
# Layout (per image, leading grid dim of size 1):
#   rois_ref : (1, 4, Npad) f32   rows = x1, y1, x2, y2 ; proposals on the lane axis
#   gt_ref   : (1, K, 5)    f32   cols = x1, y1, x2, y2, class ; gt boxes on sublanes
# output (merged lane-dense slab):
#   out_ref  : (1, 3, Npad) f32   rows = max_overlap, argmax (as f32), label
# ----------------------------------------------------------------------------
def _overlap_kernel(rois_ref, gt_ref, out_ref):
    rois = rois_ref[0]                      # (4, Npad)
    gt = gt_ref[0]                          # (K, 5)

    ax1 = rois[0:1, :]
    ay1 = rois[1:2, :]
    ax2 = rois[2:3, :]
    ay2 = rois[3:4, :]                      # (1, N)

    gx1 = gt[:, 0:1]
    gy1 = gt[:, 1:2]
    gx2 = gt[:, 2:3]
    gy2 = gt[:, 3:4]
    glab = gt[:, 4:5]                       # (K, 1)

    aw = ax2 - ax1 + 1.0
    ah = ay2 - ay1 + 1.0
    a_area = aw * ah                        # (1, N)
    gw = gx2 - gx1 + 1.0
    gh = gy2 - gy1 + 1.0
    g_area = gw * gh                        # (K, 1)

    iw = jnp.maximum(jnp.minimum(ax2, gx2) - jnp.maximum(ax1, gx1) + 1.0, 0.0)  # (K, N)
    ih = jnp.maximum(jnp.minimum(ay2, gy2) - jnp.maximum(ay1, gy1) + 1.0, 0.0)

    inter = iw * ih
    ua = a_area + g_area - inter
    ov = inter * pl.reciprocal(ua, approx=False)                                # (K, N)

    gt_zero = (gw == 1.0) & (gh == 1.0)     # (K, 1) zero-area (padding) gt boxes
    a_zero = (aw == 1.0) & (ah == 1.0)      # (1, N) zero-area proposals (incl. lane padding)
    ov = jnp.where(gt_zero, 0.0, ov)
    ov = jnp.where(a_zero, -1.0, ov)

    k, n = ov.shape
    m = jnp.max(ov, axis=0, keepdims=True)                                      # (1, N)
    kio = lax.broadcasted_iota(jnp.int32, (k, n), 0)
    # first-occurrence argmax along gt axis
    idx = jnp.min(jnp.where(ov == m, kio, k), axis=0, keepdims=True)            # (1, N) i32
    # label gather as a VPU masked sum over the K sublanes (no MXU)
    lab = jnp.sum(jnp.where(kio == idx, glab, 0.0), axis=0, keepdims=True)      # (1, N)

    out_ref[0] = jnp.concatenate([m, idx.astype(jnp.float32), lab], axis=0)     # (3, N)


def overlaps_pallas(rois_t, gt_boxes):
    B, _, Npad = rois_t.shape
    K = gt_boxes.shape[1]
    return pl.pallas_call(
        _overlap_kernel,
        out_shape=jax.ShapeDtypeStruct((B, 3, Npad), jnp.float32),
        grid=(B,),
        in_specs=[
            pl.BlockSpec((1, 4, Npad), lambda b: (b, 0, 0)),
            pl.BlockSpec((1, K, 5), lambda b: (b, 0, 0)),
        ],
        out_specs=pl.BlockSpec((1, 3, Npad), lambda b: (b, 0, 0)),
        compiler_params=pltpu.CompilerParams(dimension_semantics=("parallel",)),
    )(rois_t, gt_boxes)


# ----------------------------------------------------------------------------
# Kernel B: bbox regression targets + normalization + fg masking + weights.
#   x_ref   : (1, 9, R) f32  rows 0-3 = ex (x1,y1,x2,y2), 4-7 = gt coords, 8 = label
#   out_ref : (1, 12, R) f32 rows 0-3 = targets, 4-7 = inside weights, 8-11 = outside weights
# ----------------------------------------------------------------------------
def _target_kernel(x_ref, out_ref):
    x = x_ref[0]                            # (9, R)
    ex_x1 = x[0:1, :]
    ex_y1 = x[1:2, :]
    ex_x2 = x[2:3, :]
    ex_y2 = x[3:4, :]
    gt_x1 = x[4:5, :]
    gt_y1 = x[5:6, :]
    gt_x2 = x[6:7, :]
    gt_y2 = x[7:8, :]
    lab = x[8:9, :]

    ex_w = ex_x2 - ex_x1 + 1.0
    ex_h = ex_y2 - ex_y1 + 1.0
    inv_w = pl.reciprocal(ex_w, approx=False)
    inv_h = pl.reciprocal(ex_h, approx=False)
    ex_cx = ex_x1 + 0.5 * ex_w
    ex_cy = ex_y1 + 0.5 * ex_h

    gt_w = gt_x2 - gt_x1 + 1.0
    gt_h = gt_y2 - gt_y1 + 1.0
    gt_cx = gt_x1 + 0.5 * gt_w
    gt_cy = gt_y1 + 0.5 * gt_h

    tx = (gt_cx - ex_cx) * inv_w
    ty = (gt_cy - ex_cy) * inv_h
    tw = jnp.log(gt_w * inv_w)
    th = jnp.log(gt_h * inv_h)

    if BBOX_NORMALIZE_TARGETS_PRECOMPUTED:
        tx = tx * _INV_STD[0] + _NEG_MEAN_OVER_STD[0]
        ty = ty * _INV_STD[1] + _NEG_MEAN_OVER_STD[1]
        tw = tw * _INV_STD[2] + _NEG_MEAN_OVER_STD[2]
        th = th * _INV_STD[3] + _NEG_MEAN_OVER_STD[3]

    mask = lab > 0.0                        # (1, R)
    tgt = jnp.concatenate(
        [jnp.where(mask, tx, 0.0),
         jnp.where(mask, ty, 0.0),
         jnp.where(mask, tw, 0.0),
         jnp.where(mask, th, 0.0)], axis=0)                                      # (4, R)
    iw = jnp.concatenate(
        [jnp.where(mask, BBOX_INSIDE_WEIGHTS[0], 0.0),
         jnp.where(mask, BBOX_INSIDE_WEIGHTS[1], 0.0),
         jnp.where(mask, BBOX_INSIDE_WEIGHTS[2], 0.0),
         jnp.where(mask, BBOX_INSIDE_WEIGHTS[3], 0.0)], axis=0)                  # (4, R)
    ow = (iw > 0.0).astype(jnp.float32)                                          # (4, R)

    out_ref[0] = jnp.concatenate([tgt, iw, ow], axis=0)                          # (12, R)


def targets_pallas(xin):
    B, _, R = xin.shape
    return pl.pallas_call(
        _target_kernel,
        out_shape=jax.ShapeDtypeStruct((B, 12, R), jnp.float32),
        grid=(B,),
        in_specs=[pl.BlockSpec((1, 9, R), lambda b: (b, 0, 0))],
        out_specs=pl.BlockSpec((1, 12, R), lambda b: (b, 0, 0)),
        compiler_params=pltpu.CompilerParams(dimension_semantics=("parallel",)),
    )(xin)


# ----------------------------------------------------------------------------
# Full forward (semantics of _ProposalTargetLayer.forward), single jitted function,
# no host round trips.
# ----------------------------------------------------------------------------
@jax.jit
def _proposal_target_impl(all_rois, gt_boxes, key):
    all_rois = all_rois.astype(jnp.float32)
    gt_boxes = gt_boxes.astype(jnp.float32)
    B, P, _ = all_rois.shape
    K = gt_boxes.shape[1]
    N = P + K
    Npad = ((N + 127) // 128) * 128

    R = int(TRAIN_BATCH_SIZE)                               # rois_per_image
    fg_rois = int(np.round(TRAIN_FG_FRACTION * R))
    fg_rois = 1 if fg_rois == 0 else fg_rois

    # append gt boxes as extra rois ([0, x1, y1, x2, y2])
    gt_append = jnp.zeros((B, K, 5), jnp.float32).at[:, :, 1:5].set(gt_boxes[:, :, :4])
    rois_all = jnp.concatenate([all_rois, gt_append], axis=1)        # (B, N, 5)

    # Kernel A: lane-dense transposed coords, padded to a multiple of 128 lanes.
    coords = rois_all[:, :, 1:5]                                     # (B, N, 4)
    coords_pad = jnp.pad(coords, ((0, 0), (0, Npad - N), (0, 0)))
    rois_t = jnp.transpose(coords_pad, (0, 2, 1))                    # (B, 4, Npad)

    out_a = overlaps_pallas(rois_t, gt_boxes)                        # (B, 3, Npad)
    max_ov = out_a[:, 0, :N]                                         # (B, N)
    gt_asn = out_a[:, 1, :N].astype(jnp.int32)                       # (B, N)
    labels = out_a[:, 2, :N]                                         # (B, N)

    # ------------------------------------------------------------------
    # On-device fg/bg subsampling (fixed-size masked selection).
    # TODO(synk): the random draws use jax.random, so the sampled index set differs
    # from torch.randperm / np.random in the reference (structure & sizes match).
    # The "fg==0 and bg==0" error branch of the reference is not reproduced on device
    # (it cannot occur because gt boxes are appended as proposals with IoU==1).
    # ------------------------------------------------------------------
    def select_one(max_ov_i, key_i):
        fg_mask = max_ov_i >= FG_THRESH
        bg_mask = (max_ov_i < BG_THRESH_HI) & (max_ov_i >= BG_THRESH_LO)
        fg_num = jnp.sum(fg_mask.astype(jnp.int32))
        bg_num = jnp.sum(bg_mask.astype(jnp.int32))
        k1, k2, k3 = jax.random.split(key_i, 3)

        # random permutation of fg indices (fg first, shuffled)
        rperm = jax.random.uniform(k1, (N,))
        fg_perm = jnp.argsort(jnp.where(fg_mask, rperm, 2.0)).astype(jnp.int32)

        # ordered index lists for with-replacement sampling
        idxs = jnp.arange(N, dtype=jnp.int32)
        fg_list = jnp.argsort(jnp.where(fg_mask, idxs, N + idxs)).astype(jnp.int32)
        bg_list = jnp.argsort(jnp.where(bg_mask, idxs, N + idxs)).astype(jnp.int32)

        rf = jax.random.uniform(k2, (R,))
        rb = jax.random.uniform(k3, (R,))
        fg_pick = jnp.clip(jnp.floor(rf * fg_num.astype(jnp.float32)).astype(jnp.int32),
                           0, jnp.maximum(fg_num - 1, 0))
        bg_pick = jnp.clip(jnp.floor(rb * bg_num.astype(jnp.float32)).astype(jnp.int32),
                           0, jnp.maximum(bg_num - 1, 0))
        fg_sample = fg_list[fg_pick]
        bg_sample = bg_list[bg_pick]

        both = (fg_num > 0) & (bg_num > 0)
        fg_this = jnp.where(both, jnp.minimum(fg_rois, fg_num),
                            jnp.where(fg_num > 0, R, 0)).astype(jnp.int32)

        j = jnp.arange(R, dtype=jnp.int32)
        keep_both = jnp.where(j < fg_this, fg_perm[:R], bg_sample)
        keep = jnp.where(both, keep_both,
                         jnp.where(fg_num > 0, fg_sample, bg_sample))
        return keep.astype(jnp.int32), fg_this

    keys = jax.random.split(key, B)
    keep, fg_this = jax.vmap(select_one)(max_ov, keys)               # (B, R), (B,)

    # gathers (jitted JAX, no host sync)
    lab_keep = jnp.take_along_axis(labels, keep, axis=1)             # (B, R)
    lab_keep = jnp.where(jnp.arange(R, dtype=jnp.int32)[None, :] < fg_this[:, None],
                         lab_keep, 0.0)

    keep5 = jnp.broadcast_to(keep[:, :, None], (B, R, 5))
    rois_keep = jnp.take_along_axis(rois_all, keep5, axis=1)         # (B, R, 5)
    batch_col = jnp.broadcast_to(jnp.arange(B, dtype=jnp.float32)[:, None], (B, R))
    rois_keep = rois_keep.at[:, :, 0].set(batch_col)

    gt_asn_keep = jnp.take_along_axis(gt_asn, keep, axis=1)          # (B, R)
    gt_keep = jnp.take_along_axis(
        gt_boxes, jnp.broadcast_to(gt_asn_keep[:, :, None], (B, R, 5)), axis=1)  # (B, R, 5)

    # Kernel B: merged (9, R) per-image input -> merged (12, R) output
    xin = jnp.concatenate(
        [jnp.transpose(rois_keep[:, :, 1:5], (0, 2, 1)),
         jnp.transpose(gt_keep[:, :, 0:4], (0, 2, 1)),
         lab_keep[:, None, :]], axis=1)                              # (B, 9, R)

    out_b = targets_pallas(xin)                                      # (B, 12, R)
    bbox_targets = jnp.transpose(out_b[:, 0:4, :], (0, 2, 1))        # (B, R, 4)
    bbox_inside_w = jnp.transpose(out_b[:, 4:8, :], (0, 2, 1))       # (B, R, 4)
    bbox_outside_w = jnp.transpose(out_b[:, 8:12, :], (0, 2, 1))     # (B, R, 4)

    return rois_keep, lab_keep, bbox_targets, bbox_inside_w, bbox_outside_w


def proposal_target_forward(all_rois, gt_boxes, num_boxes, num_classes=NUM_CLASSES, key=None):
    # TODO(synk): num_boxes is ignored (as in the reference math); all-zero padded gt rows
    # are neutralized only via the zero-area overlap mask.
    del num_boxes, num_classes
    if key is None:
        key = jax.random.PRNGKey(0)
    return _proposal_target_impl(jnp.asarray(all_rois, jnp.float32),
                                 jnp.asarray(gt_boxes, jnp.float32), key)


if __name__ == "__main__":
    key = jax.random.PRNGKey(0)
    k1, k2, k3, k4, k5 = jax.random.split(key, 5)

    B, P, K = 1, 24, 4       # 1 image, 24 proposals, 4 ground-truth boxes
    IMG = 64.0

    # ground-truth boxes: [x1, y1, x2, y2, class]
    gxy = jax.random.uniform(k1, (B, K, 2), minval=0.0, maxval=IMG * 0.6)
    gwh = jax.random.uniform(k2, (B, K, 2), minval=8.0, maxval=IMG * 0.4)
    gcls = jax.random.randint(k3, (B, K, 1), 1, NUM_CLASSES).astype(jnp.float32)
    gt_boxes = jnp.concatenate([gxy, gxy + gwh, gcls], axis=-1)

    # proposals: [0, x1, y1, x2, y2]
    pxy = jax.random.uniform(k4, (B, P, 2), minval=0.0, maxval=IMG * 0.7)
    pwh = jax.random.uniform(k5, (B, P, 2), minval=4.0, maxval=IMG * 0.3)
    all_rois = jnp.concatenate([jnp.zeros((B, P, 1)), pxy, pxy + pwh], axis=-1)

    num_boxes = jnp.array([K], jnp.int32)

    outs = proposal_target_forward(all_rois, gt_boxes, num_boxes, NUM_CLASSES)
    outs = jax.block_until_ready(outs)

    rois, labels, tgts, iw, ow = outs
    R = TRAIN_BATCH_SIZE
    assert rois.shape == (B, R, 5)
    assert labels.shape == (B, R)
    assert tgts.shape == (B, R, 4)
    assert iw.shape == (B, R, 4)
    assert ow.shape == (B, R, 4)
    assert bool(jnp.all(jnp.isfinite(tgts)))
    print("KERNEL_OK")
</pallas_src>

<mosaic_0001>
module attributes {stable_mosaic.version = 11 : i64} {
  func.func @_overlap_kernel(%arg0: i32, %arg1: memref<1x4x128xf32, #tpu.memory_space<vmem>>, %arg2: memref<1x4x5xf32, #tpu.memory_space<vmem>>, %arg3: memref<1x3x128xf32, #tpu.memory_space<vmem>>) attributes {dimension_semantics = [#tpu.dimension_semantics<parallel>], iteration_bounds = array<i64: 1>, scalar_prefetch = 0 : i64, scratch_operands = 0 : i64, tpu.core_type = #tpu.core_type<tc>, window_params = [{transform_indices = @transform_0, window_bounds = array<i64: 1, 4, 128>}, {transform_indices = @transform_1, window_bounds = array<i64: 1, 4, 5>}, {transform_indices = @transform_2, window_bounds = array<i64: 1, 3, 128>}]} {
    %c0 = arith.constant 0 : index
    %c0_0 = arith.constant 0 : index
    %c0_1 = arith.constant 0 : index
    %0 = vector.load %arg1[%c0, %c0_0, %c0_1] : memref<1x4x128xf32, #tpu.memory_space<vmem>>, vector<1x4x128xf32>
    %1 = vector.shape_cast %0 : vector<1x4x128xf32> to vector<4x128xf32>
    %c0_2 = arith.constant 0 : index
    %c0_3 = arith.constant 0 : index
    %c0_4 = arith.constant 0 : index
    %2 = vector.load %arg2[%c0_2, %c0_3, %c0_4] : memref<1x4x5xf32, #tpu.memory_space<vmem>>, vector<1x4x5xf32>
    %3 = vector.shape_cast %2 : vector<1x4x5xf32> to vector<4x5xf32>
    %4 = vector.extract_strided_slice %1 {offsets = [0, 0], sizes = [1, 128], strides = [1, 1]} : vector<4x128xf32> to vector<1x128xf32>
    %5 = vector.extract_strided_slice %1 {offsets = [1, 0], sizes = [1, 128], strides = [1, 1]} : vector<4x128xf32> to vector<1x128xf32>
    %6 = vector.extract_strided_slice %1 {offsets = [2, 0], sizes = [1, 128], strides = [1, 1]} : vector<4x128xf32> to vector<1x128xf32>
    %7 = vector.extract_strided_slice %1 {offsets = [3, 0], sizes = [1, 128], strides = [1, 1]} : vector<4x128xf32> to vector<1x128xf32>
    %8 = vector.extract_strided_slice %3 {offsets = [0, 0], sizes = [4, 1], strides = [1, 1]} : vector<4x5xf32> to vector<4x1xf32>
    %9 = vector.extract_strided_slice %3 {offsets = [0, 1], sizes = [4, 1], strides = [1, 1]} : vector<4x5xf32> to vector<4x1xf32>
    %10 = vector.extract_strided_slice %3 {offsets = [0, 2], sizes = [4, 1], strides = [1, 1]} : vector<4x5xf32> to vector<4x1xf32>
    %11 = vector.extract_strided_slice %3 {offsets = [0, 3], sizes = [4, 1], strides = [1, 1]} : vector<4x5xf32> to vector<4x1xf32>
    %12 = vector.extract_strided_slice %3 {offsets = [0, 4], sizes = [4, 1], strides = [1, 1]} : vector<4x5xf32> to vector<4x1xf32>
    %13 = arith.subf %6, %4 : vector<1x128xf32>
    %cst = arith.constant 1.000000e+00 : f32
    %14 = vector.broadcast %cst : f32 to vector<1x128xf32>
    %15 = arith.addf %13, %14 : vector<1x128xf32>
    %16 = arith.subf %7, %5 : vector<1x128xf32>
    %cst_5 = arith.constant 1.000000e+00 : f32
    %17 = vector.broadcast %cst_5 : f32 to vector<1x128xf32>
    %18 = arith.addf %16, %17 : vector<1x128xf32>
    %19 = arith.mulf %15, %18 : vector<1x128xf32>
    %20 = arith.subf %10, %8 : vector<4x1xf32>
    %cst_6 = arith.constant 1.000000e+00 : f32
    %21 = vector.broadcast %cst_6 : f32 to vector<4x1xf32>
    %22 = arith.addf %20, %21 : vector<4x1xf32>
    %23 = arith.subf %11, %9 : vector<4x1xf32>
    %cst_7 = arith.constant 1.000000e+00 : f32
    %24 = vector.broadcast %cst_7 : f32 to vector<4x1xf32>
    %25 = arith.addf %23, %24 : vector<4x1xf32>
    %26 = arith.mulf %22, %25 : vector<4x1xf32>
    %27 = vector.broadcast %6 : vector<1x128xf32> to vector<4x128xf32>
    %28 = vector.broadcast %10 : vector<4x1xf32> to vector<4x128xf32>
    %29 = arith.minimumf %27, %28 : vector<4x128xf32>
    %30 = vector.broadcast %4 : vector<1x128xf32> to vector<4x128xf32>
    %31 = vector.broadcast %8 : vector<4x1xf32> to vector<4x128xf32>
    %32 = arith.maximumf %30, %31 : vector<4x128xf32>
    %33 = arith.subf %29, %32 : vector<4x128xf32>
    %cst_8 = arith.constant 1.000000e+00 : f32
    %34 = vector.broadcast %cst_8 : f32 to vector<4x128xf32>
    %35 = arith.addf %33, %34 : vector<4x128xf32>
    %cst_9 = arith.constant 0.000000e+00 : f32
    %36 = vector.broadcast %cst_9 : f32 to vector<4x128xf32>
    %37 = arith.maximumf %35, %36 : vector<4x128xf32>
    %38 = vector.broadcast %7 : vector<1x128xf32> to vector<4x128xf32>
    %39 = vector.broadcast %11 : vector<4x1xf32> to vector<4x128xf32>
    %40 = arith.minimumf %38, %39 : vector<4x128xf32>
    %41 = vector.broadcast %5 : vector<1x128xf32> to vector<4x128xf32>
    %42 = vector.broadcast %9 : vector<4x1xf32> to vector<4x128xf32>
    %43 = arith.maximumf %41, %42 : vector<4x128xf32>
    %44 = arith.subf %40, %43 : vector<4x128xf32>
    %cst_10 = arith.constant 1.000000e+00 : f32
    %45 = vector.broadcast %cst_10 : f32 to vector<4x128xf32>
    %46 = arith.addf %44, %45 : vector<4x128xf32>
    %cst_11 = arith.constant 0.000000e+00 : f32
    %47 = vector.broadcast %cst_11 : f32 to vector<4x128xf32>
    %48 = arith.maximumf %46, %47 : vector<4x128xf32>
    %49 = arith.mulf %37, %48 : vector<4x128xf32>
    %50 = vector.broadcast %19 : vector<1x128xf32> to vector<4x128xf32>
    %51 = vector.broadcast %26 : vector<4x1xf32> to vector<4x128xf32>
    %52 = arith.addf %50, %51 : vector<4x128xf32>
    %53 = arith.subf %52, %49 : vector<4x128xf32>
    %54 = tpu.reciprocal %53 : vector<4x128xf32> -> vector<4x128xf32>
    %55 = arith.mulf %49, %54 : vector<4x128xf32>
    %cst_12 = arith.constant 1.000000e+00 : f32
    %56 = vector.broadcast %cst_12 : f32 to vector<4x1xf32>
    %57 = arith.cmpf oeq, %22, %56 : vector<4x1xf32>
    %cst_13 = arith.constant 1.000000e+00 : f32
    %58 = vector.broadcast %cst_13 : f32 to vector<4x1xf32>
    %59 = arith.cmpf oeq, %25, %58 : vector<4x1xf32>
    %60 = arith.andi %57, %59 : vector<4x1xi1>
    %cst_14 = arith.constant 1.000000e+00 : f32
    %61 = vector.broadcast %cst_14 : f32 to vector<1x128xf32>
    %62 = arith.cmpf oeq, %15, %61 : vector<1x128xf32>
    %cst_15 = arith.constant 1.000000e+00 : f32
    %63 = vector.broadcast %cst_15 : f32 to vector<1x128xf32>
    %64 = arith.cmpf oeq, %18, %63 : vector<1x128xf32>
    %65 = arith.andi %62, %64 : vector<1x128xi1>
    %cst_16 = arith.constant 0.000000e+00 : f32
    %66 = vector.shape_cast %60 : vector<4x1xi1> to vector<4x1xi1>
    %67 = vector.broadcast %66 : vector<4x1xi1> to vector<4x128xi1>
    %68 = vector.broadcast %cst_16 : f32 to vector<4x128xf32>
    %69 = arith.select %67, %68, %55 : vector<4x128xi1>, vector<4x128xf32>
    %cst_17 = arith.constant -1.000000e+00 : f32
    %70 = vector.shape_cast %65 : vector<1x128xi1> to vector<1x128xi1>
    %71 = vector.broadcast %70 : vector<1x128xi1> to vector<4x128xi1>
    %72 = vector.broadcast %cst_17 : f32 to vector<4x128xf32>
    %73 = arith.select %71, %72, %69 : vector<4x128xi1>, vector<4x128xf32>
    %cst_18 = arith.constant dense<0xFF800000> : vector<128xf32>
    %74 = vector.multi_reduction <maximumf>, %73, %cst_18 [0] : vector<4x128xf32> to vector<128xf32>
    %75 = vector.shape_cast %74 : vector<128xf32> to vector<1x128xf32>
    %76 = tpu.iota {dimensions = array<i32: 0>} : vector<4x128xi32>
    %77 = vector.broadcast %75 : vector<1x128xf32> to vector<4x128xf32>
    %78 = arith.cmpf oeq, %73, %77 : vector<4x128xf32>
    %c4_i32 = arith.constant 4 : i32
    %79 = vector.broadcast %c4_i32 : i32 to vector<4x128xi32>
    %80 = arith.select %78, %76, %79 : vector<4x128xi1>, vector<4x128xi32>
    %cst_19 = arith.constant dense<2147483647> : vector<128xi32>
    %81 = vector.multi_reduction <minsi>, %80, %cst_19 [0] : vector<4x128xi32> to vector<128xi32>
    %82 = vector.shape_cast %81 : vector<128xi32> to vector<1x128xi32>
    %83 = vector.broadcast %82 : vector<1x128xi32> to vector<4x128xi32>
    %84 = arith.cmpi eq, %76, %83 : vector<4x128xi32>
    %cst_20 = arith.constant 0.000000e+00 : f32
    %85 = vector.shape_cast %12 : vector<4x1xf32> to vector<4x1xf32>
    %86 = vector.broadcast %85 : vector<4x1xf32> to vector<4x128xf32>
    %87 = vector.broadcast %cst_20 : f32 to vector<4x128xf32>
    %88 = arith.select %84, %86, %87 : vector<4x128xi1>, vector<4x128xf32>
    %cst_21 = arith.constant dense<0.000000e+00> : vector<128xf32>
    %89 = vector.multi_reduction <add>, %88, %cst_21 [0] : vector<4x128xf32> to vector<128xf32>
    %90 = vector.shape_cast %89 : vector<128xf32> to vector<1x128xf32>
    %91 = arith.sitofp %82 : vector<1x128xi32> to vector<1x128xf32>
    %92 = tpu.concatenate %75, %91, %90 in 0 : vector<1x128xf32>, vector<1x128xf32>, vector<1x128xf32> -> vector<3x128xf32>
    %c0_22 = arith.constant 0 : index
    %c0_23 = arith.constant 0 : index
    %c0_24 = arith.constant 0 : index
    %93 = vector.load %arg3[%c0_22, %c0_23, %c0_24] : memref<1x3x128xf32, #tpu.memory_space<vmem>>, vector<1x3x128xf32>
    %94 = vector.shape_cast %93 : vector<1x3x128xf32> to vector<3x128xf32>
    %95 = vector.shape_cast %92 : vector<3x128xf32> to vector<1x3x128xf32>
    tpu.vector_store %arg3[%c0_22, %c0_23, %c0_24], %95 {strides = array<i32>} : memref<1x3x128xf32, #tpu.memory_space<vmem>>, vector<1x3x128xf32>,
    return
  }
  func.func @transform_0(%arg0: i32) -> (i32, i32, i32) {
    %c0_i32 = arith.constant 0 : i32
    %c0_i32_0 = arith.constant 0 : i32
    %c0_i32_1 = arith.constant 0 : i32
    return %arg0, %c0_i32, %c0_i32_0 : i32, i32, i32
  }
  func.func @transform_1(%arg0: i32) -> (i32, i32, i32) {
    %c0_i32 = arith.constant 0 : i32
    %c0_i32_0 = arith.constant 0 : i32
    %c0_i32_1 = arith.constant 0 : i32
    return %arg0, %c0_i32, %c0_i32_0 : i32, i32, i32
  }
  func.func @transform_2(%arg0: i32) -> (i32, i32, i32) {
    %c0_i32 = arith.constant 0 : i32
    %c0_i32_0 = arith.constant 0 : i32
    %c0_i32_1 = arith.constant 0 : i32
    return %arg0, %c0_i32, %c0_i32_0 : i32, i32, i32
  }
}

module attributes {stable_mosaic.version = 11 : i64} {
  func.func @_target_kernel(%arg0: i32, %arg1: memref<1x9x16xf32, #tpu.memory_space<vmem>>, %arg2: memref<1x12x16xf32, #tpu.memory_space<vmem>>) attributes {dimension_semantics = [#tpu.dimension_semantics<parallel>], iteration_bounds = array<i64: 1>, scalar_prefetch = 0 : i64, scratch_operands = 0 : i64, tpu.core_type = #tpu.core_type<tc>, window_params = [{transform_indices = @transform_0, window_bounds = array<i64: 1, 9, 16>}, {transform_indices = @transform_1, window_bounds = array<i64: 1, 12, 16>}]} {
    %c0 = arith.constant 0 : index
    %c0_0 = arith.constant 0 : index
    %c0_1 = arith.constant 0 : index
    %0 = vector.load %arg1[%c0, %c0_0, %c0_1] : memref<1x9x16xf32, #tpu.memory_space<vmem>>, vector<1x9x16xf32>
    %1 = vector.shape_cast %0 : vector<1x9x16xf32> to vector<9x16xf32>
    %2 = vector.extract_strided_slice %1 {offsets = [0, 0], sizes = [1, 16], strides = [1, 1]} : vector<9x16xf32> to vector<1x16xf32>
    %3 = vector.extract_strided_slice %1 {offsets = [1, 0], sizes = [1, 16], strides = [1, 1]} : vector<9x16xf32> to vector<1x16xf32>
    %4 = vector.extract_strided_slice %1 {offsets = [2, 0], sizes = [1, 16], strides = [1, 1]} : vector<9x16xf32> to vector<1x16xf32>
    %5 = vector.extract_strided_slice %1 {offsets = [3, 0], sizes = [1, 16], strides = [1, 1]} : vector<9x16xf32> to vector<1x16xf32>
    %6 = vector.extract_strided_slice %1 {offsets = [4, 0], sizes = [1, 16], strides = [1, 1]} : vector<9x16xf32> to vector<1x16xf32>
    %7 = vector.extract_strided_slice %1 {offsets = [5, 0], sizes = [1, 16], strides = [1, 1]} : vector<9x16xf32> to vector<1x16xf32>
    %8 = vector.extract_strided_slice %1 {offsets = [6, 0], sizes = [1, 16], strides = [1, 1]} : vector<9x16xf32> to vector<1x16xf32>
    %9 = vector.extract_strided_slice %1 {offsets = [7, 0], sizes = [1, 16], strides = [1, 1]} : vector<9x16xf32> to vector<1x16xf32>
    %10 = vector.extract_strided_slice %1 {offsets = [8, 0], sizes = [1, 16], strides = [1, 1]} : vector<9x16xf32> to vector<1x16xf32>
    %11 = arith.subf %4, %2 : vector<1x16xf32>
    %cst = arith.constant 1.000000e+00 : f32
    %12 = vector.broadcast %cst : f32 to vector<1x16xf32>
    %13 = arith.addf %11, %12 : vector<1x16xf32>
    %14 = arith.subf %5, %3 : vector<1x16xf32>
    %cst_2 = arith.constant 1.000000e+00 : f32
    %15 = vector.broadcast %cst_2 : f32 to vector<1x16xf32>
    %16 = arith.addf %14, %15 : vector<1x16xf32>
    %17 = tpu.reciprocal %13 : vector<1x16xf32> -> vector<1x16xf32>
    %18 = tpu.reciprocal %16 : vector<1x16xf32> -> vector<1x16xf32>
    %cst_3 = arith.constant 5.000000e-01 : f32
    %19 = vector.broadcast %cst_3 : f32 to vector<1x16xf32>
    %20 = arith.mulf %19, %13 : vector<1x16xf32>
    %21 = arith.addf %2, %20 : vector<1x16xf32>
    %cst_4 = arith.constant 5.000000e-01 : f32
    %22 = vector.broadcast %cst_4 : f32 to vector<1x16xf32>
    %23 = arith.mulf %22, %16 : vector<1x16xf32>
    %24 = arith.addf %3, %23 : vector<1x16xf32>
    %25 = arith.subf %8, %6 : vector<1x16xf32>
    %cst_5 = arith.constant 1.000000e+00 : f32
    %26 = vector.broadcast %cst_5 : f32 to vector<1x16xf32>
    %27 = arith.addf %25, %26 : vector<1x16xf32>
    %28 = arith.subf %9, %7 : vector<1x16xf32>
    %cst_6 = arith.constant 1.000000e+00 : f32
    %29 = vector.broadcast %cst_6 : f32 to vector<1x16xf32>
    %30 = arith.addf %28, %29 : vector<1x16xf32>
    %cst_7 = arith.constant 5.000000e-01 : f32
    %31 = vector.broadcast %cst_7 : f32 to vector<1x16xf32>
    %32 = arith.mulf %31, %27 : vector<1x16xf32>
    %33 = arith.addf %6, %32 : vector<1x16xf32>
    %cst_8 = arith.constant 5.000000e-01 : f32
    %34 = vector.broadcast %cst_8 : f32 to vector<1x16xf32>
    %35 = arith.mulf %34, %30 : vector<1x16xf32>
    %36 = arith.addf %7, %35 : vector<1x16xf32>
    %37 = arith.subf %33, %21 : vector<1x16xf32>
    %38 = arith.mulf %37, %17 : vector<1x16xf32>
    %39 = arith.subf %36, %24 : vector<1x16xf32>
    %40 = arith.mulf %39, %18 : vector<1x16xf32>
    %41 = arith.mulf %27, %17 : vector<1x16xf32>
    %42 = math.log %41 : vector<1x16xf32>
    %43 = arith.mulf %30, %18 : vector<1x16xf32>
    %44 = math.log %43 : vector<1x16xf32>
    %cst_9 = arith.constant 1.000000e+01 : f32
    %45 = vector.broadcast %cst_9 : f32 to vector<1x16xf32>
    %46 = arith.mulf %38, %45 : vector<1x16xf32>
    %cst_10 = arith.constant -0.000000e+00 : f32
    %47 = vector.broadcast %cst_10 : f32 to vector<1x16xf32>
    %48 = arith.addf %46, %47 : vector<1x16xf32>
    %cst_11 = arith.constant 1.000000e+01 : f32
    %49 = vector.broadcast %cst_11 : f32 to vector<1x16xf32>
    %50 = arith.mulf %40, %49 : vector<1x16xf32>
    %cst_12 = arith.constant -0.000000e+00 : f32
    %51 = vector.broadcast %cst_12 : f32 to vector<1x16xf32>
    %52 = arith.addf %50, %51 : vector<1x16xf32>
    %cst_13 = arith.constant 5.000000e+00 : f32
    %53 = vector.broadcast %cst_13 : f32 to vector<1x16xf32>
    %54 = arith.mulf %42, %53 : vector<1x16xf32>
    %cst_14 = arith.constant -0.000000e+00 : f32
    %55 = vector.broadcast %cst_14 : f32 to vector<1x16xf32>
    %56 = arith.addf %54, %55 : vector<1x16xf32>
    %cst_15 = arith.constant 5.000000e+00 : f32
    %57 = vector.broadcast %cst_15 : f32 to vector<1x16xf32>
    %58 = arith.mulf %44, %57 : vector<1x16xf32>
    %cst_16 = arith.constant -0.000000e+00 : f32
    %59 = vector.broadcast %cst_16 : f32 to vector<1x16xf32>
    %60 = arith.addf %58, %59 : vector<1x16xf32>
    %cst_17 = arith.constant 0.000000e+00 : f32
    %61 = vector.broadcast %cst_17 : f32 to vector<1x16xf32>
    %62 = arith.cmpf ogt, %10, %61 : vector<1x16xf32>
    %cst_18 = arith.constant 0.000000e+00 : f32
    %63 = vector.broadcast %cst_18 : f32 to vector<1x16xf32>
    %64 = arith.select %62, %48, %63 : vector<1x16xi1>, vector<1x16xf32>
    %cst_19 = arith.constant 0.000000e+00 : f32
    %65 = vector.broadcast %cst_19 : f32 to vector<1x16xf32>
    %66 = arith.select %62, %52, %65 : vector<1x16xi1>, vector<1x16xf32>
    %cst_20 = arith.constant 0.000000e+00 : f32
    %67 = vector.broadcast %cst_20 : f32 to vector<1x16xf32>
    %68 = arith.select %62, %56, %67 : vector<1x16xi1>, vector<1x16xf32>
    %cst_21 = arith.constant 0.000000e+00 : f32
    %69 = vector.broadcast %cst_21 : f32 to vector<1x16xf32>
    %70 = arith.select %62, %60, %69 : vector<1x16xi1>, vector<1x16xf32>
    %71 = tpu.concatenate %64, %66, %68, %70 in 0 : vector<1x16xf32>, vector<1x16xf32>, vector<1x16xf32>, vector<1x16xf32> -> vector<4x16xf32>
    %cst_22 = arith.constant 1.000000e+00 : f32
    %cst_23 = arith.constant 0.000000e+00 : f32
    %72 = vector.broadcast %cst_22 : f32 to vector<1x16xf32>
    %73 = vector.broadcast %cst_23 : f32 to vector<1x16xf32>
    %74 = arith.select %62, %72, %73 : vector<1x16xi1>, vector<1x16xf32>
    %cst_24 = arith.constant 1.000000e+00 : f32
    %cst_25 = arith.constant 0.000000e+00 : f32
    %75 = vector.broadcast %cst_24 : f32 to vector<1x16xf32>
    %76 = vector.broadcast %cst_25 : f32 to vector<1x16xf32>
    %77 = arith.select %62, %75, %76 : vector<1x16xi1>, vector<1x16xf32>
    %cst_26 = arith.constant 1.000000e+00 : f32
    %cst_27 = arith.constant 0.000000e+00 : f32
    %78 = vector.broadcast %cst_26 : f32 to vector<1x16xf32>
    %79 = vector.broadcast %cst_27 : f32 to vector<1x16xf32>
    %80 = arith.select %62, %78, %79 : vector<1x16xi1>, vector<1x16xf32>
    %cst_28 = arith.constant 1.000000e+00 : f32
    %cst_29 = arith.constant 0.000000e+00 : f32
    %81 = vector.broadcast %cst_28 : f32 to vector<1x16xf32>
    %82 = vector.broadcast %cst_29 : f32 to vector<1x16xf32>
    %83 = arith.select %62, %81, %82 : vector<1x16xi1>, vector<1x16xf32>
    %84 = tpu.concatenate %74, %77, %80, %83 in 0 : vector<1x16xf32>, vector<1x16xf32>, vector<1x16xf32>, vector<1x16xf32> -> vector<4x16xf32>
    %cst_30 = arith.constant 0.000000e+00 : f32
    %85 = vector.broadcast %cst_30 : f32 to vector<4x16xf32>
    %86 = arith.cmpf ogt, %84, %85 : vector<4x16xf32>
    %87 = arith.extui %86 : vector<4x16xi1> to vector<4x16xi32>
    %88 = arith.sitofp %87 : vector<4x16xi32> to vector<4x16xf32>
    %89 = tpu.concatenate %71, %84, %88 in 0 : vector<4x16xf32>, vector<4x16xf32>, vector<4x16xf32> -> vector<12x16xf32>
    %c0_31 = arith.constant 0 : index
    %c0_32 = arith.constant 0 : index
    %c0_33 = arith.constant 0 : index
    %90 = vector.load %arg2[%c0_31, %c0_32, %c0_33] : memref<1x12x16xf32, #tpu.memory_space<vmem>>, vector<1x12x16xf32>
    %91 = vector.shape_cast %90 : vector<1x12x16xf32> to vector<12x16xf32>
    %92 = vector.shape_cast %89 : vector<12x16xf32> to vector<1x12x16xf32>
    tpu.vector_store %arg2[%c0_31, %c0_32, %c0_33], %92 {strides = array<i32>} : memref<1x12x16xf32, #tpu.memory_space<vmem>>, vector<1x12x16xf32>,
    return
  }
  func.func @transform_0(%arg0: i32) -> (i32, i32, i32) {
    %c0_i32 = arith.constant 0 : i32
    %c0_i32_0 = arith.constant 0 : i32
    %c0_i32_1 = arith.constant 0 : i32
    return %arg0, %c0_i32, %c0_i32_0 : i32, i32, i32
  }
  func.func @transform_1(%arg0: i32) -> (i32, i32, i32) {
    %c0_i32 = arith.constant 0 : i32
    %c0_i32_0 = arith.constant 0 : i32
    %c0_i32_1 = arith.constant 0 : i32
    return %arg0, %c0_i32, %c0_i32_0 : i32, i32, i32
  }
}

</mosaic_0001>

<llo_original>
// kernel: _proposal_target_impl.4
$region0: #{_proposal_target_impl.4}
  #allocation0 [shape = 'u32[]', space=smem, size = 0x4, offset = 0x4, fixed_abs, tag = 'smem constant byte address 0x4 - core index']
  #allocation1 [shape = 'u32[144,128]{1,0:T(1,128)}', space=vmem, size = 0x12000, scoped, tag = 'internal scratch']
  %s0 = inlined_call_operand.vmem [shape: f32[1,4,128], index: 0, kind: input, shape index: {}]
  %s1 = inlined_call_operand.vmem [shape: f32[1,4,5], index: 1, kind: input, shape index: {}]
  %s2 = inlined_call_operand.vmem [shape: f32[1,3,128], index: 2, kind: output, shape index: {}]
  %s3 = sld [smem:[#allocation0]]
  $region18: #{_proposal_target_impl.4} parent=0
    _
  %s5 = ssub.s32 1, %s3
  %s6 = scalar_select 0, %s5, %s3
  // Predicated region
  $region2: #{_proposal_target_impl.4} parent=0 // pred_check
    _
  $region3: #{_proposal_target_impl.4} parent=0 // pred_check_branch
    %8 = sbr.rel (0) target = $region5
  $region4: #{_proposal_target_impl.4} parent=0 // pred_region
    _
  $region5: #{_proposal_target_impl.4} parent=0 // pred_fallthru
    _
  // Predicated region
  $region6: #{_proposal_target_impl.4} parent=0 // pred_check
    _
  $region7: #{_proposal_target_impl.4} parent=0 // pred_check_branch
    %10 = sbr.rel (0) target = $region9
  $region8: #{_proposal_target_impl.4} parent=0 // pred_region
    _
  $region9: #{_proposal_target_impl.4} parent=0 // pred_fallthru
    _
  %v11 = vld [vmem:[%s0] sm:$0xf]
  %v12 = vld [vmem:[%s1] sm:$0xf]
  %v14 = vrot.slane %v11, 6
  %v16 = vsub.f32 %v11, %v14
  %v17 = vadd.f32 %v16, 1.0
  %v19 = vrot.slane %v17, 1
  %v21 = vmul.f32 %v17, %v19
  %23 = vrot.lane.b32.xlu0 %v12, 2
  %v24 = vpop.permute.xlu0 %23
  %v26 = vsub.f32 %v12, %v24
  %v27 = vadd.f32 %v26, 1.0
  %29 = vrot.lane.b32.xlu0 %v27, 127
  %v30 = vpop.permute.xlu0 %29
  %v32 = vmul.f32 %v27, %v30
  %v33 = vlaneseq
  %v34 = vshrl.u32 %v33, 7
  %v35 = vsub.s32 2, %v34
  %v36 = vrot.slane %v11, %v35
  %37 = vset.pattern.permute.xlu0 2
  %38 = vperm.xlu0 %37, %v12
  %v39 = vpop.permute.xlu0 %38
  %v41 = vmin.f32 %v36, %v39
  %v42 = vlaneseq
  %v43 = vshrl.u32 %v42, 7
  %v44 = vsub.s32 0, %v43
  %v45 = vrot.slane %v11, %v44
  %46 = vset.pattern.permute.xlu0 0
  %47 = vperm.xlu0 %46, %v12
  %v48 = vpop.permute.xlu0 %47
  %v50 = vmax.f32 %v45, %v48
  %v51 = vsub.f32 %v41, %v50
  %v52 = vadd.f32 %v51, 1.0
  %v53 = vmax.f32 %v52, 0.0
  %v54 = vlaneseq
  %v55 = vshrl.u32 %v54, 7
  %v56 = vsub.s32 3, %v55
  %v57 = vrot.slane %v11, %v56
  %58 = vset.pattern.permute.xlu0 3
  %59 = vperm.xlu0 %58, %v12
  %v60 = vpop.permute.xlu0 %59
  %v62 = vmin.f32 %v57, %v60
  %v63 = vlaneseq
  %v64 = vshrl.u32 %v63, 7
  %v65 = vsub.s32 1, %v64
  %v66 = vrot.slane %v11, %v65
  %67 = vset.pattern.permute.xlu0 1
  %68 = vperm.xlu0 %67, %v12
  %v69 = vpop.permute.xlu0 %68
  %v71 = vmax.f32 %v66, %v69
  %v72 = vsub.f32 %v62, %v71
  %v73 = vadd.f32 %v72, 1.0
  %v74 = vmax.f32 %v73, 0.0
  %v75 = vmul.f32 %v53, %v74
  %v76 = vlaneseq
  %v77 = vshrl.u32 %v76, 7
  %v78 = vsub.s32 2, %v77
  %v79 = vrot.slane %v21, %v78
  %81 = vset.pattern.permute.xlu0 2
  %82 = vperm.xlu0 %81, %v32
  %v83 = vpop.permute.xlu0 %82
  %v85 = vadd.f32 %v79, %v83
  %v86 = vsub.f32 %v85, %v75
  %v87 = vrcp.pop %v86
  %v88 = vmul.f32 %v75, %v87
  %vm89 = vcmp.eq.f32.partialorder %v27, 1.0
  %v90 = vsel %vm89, 1, 0
  %91 = vrot.lane.b32.xlu0 %v90, 127
  %v92 = vpop.permute.xlu0 %91
  %vm93 = vcmp.ne.s32.totalorder %v92, 0
  %vm94 = vmand %vm89, %vm93
  %vm95 = vcmp.eq.f32.partialorder %v17, 1.0
  %v96 = vsel %vm95, 1, 0
  %v97 = vrot.slane %v96, 1
  %vm98 = vcmp.ne.s32.totalorder %v97, 0
  %vm99 = vmand %vm95, %vm98
  %v100 = vsel %vm94, 1, 0
  %101 = vset.pattern.permute.xlu0 2
  %102 = vperm.xlu0 %101, %v100
  %v103 = vpop.permute.xlu0 %102
  %vm104 = vcmp.eq.s32.totalorder %v103, 1
  %v105 = vsel %vm104, 0.0, %v88
  %v106 = vsel %vm99, 1, 0
  %v107 = vlaneseq
  %v108 = vshrl.u32 %v107, 7
  %v109 = vsub.s32 2, %v108
  %v110 = vrot.slane %v106, %v109
  %vm111 = vcmp.eq.s32.totalorder %v110, 1
  %v112 = vsel %vm111, -1.0, %v105
  %vm113 = vcmask 1043456
  %v114 = vsel %vm113, %v112, -inf
  %v115 = vrot.slane %v114, 4
  %v116 = vmax.f32 %v114, %v115
  %v117 = vrot.slane %v116, 2
  %v118 = vmax.f32 %v116, %v117
  %v119 = vrot.slane %v118, 1
  %v120 = vmax.f32 %v118, %v119
  %v121 = vlaneseq
  %v122 = vshrl.u32 %v121, 7
  %vm123 = vcmp.eq.f32.partialorder %v112, %v120
  %v124 = vsel %vm123, %v122, 4
  %v125 = vsel %vm113, %v124, 2147483647
  %v126 = vrot.slane %v125, 4
  %vm127 = vcmp.lt.s32.totalorder %v125, %v126
  %v128 = vsel %vm127, %v125, %v126
  %v129 = vrot.slane %v128, 2
  %vm130 = vcmp.lt.s32.totalorder %v128, %v129
  %v131 = vsel %vm130, %v128, %v129
  %v132 = vrot.slane %v131, 1
  %vm133 = vcmp.lt.s32.totalorder %v131, %v132
  %v134 = vsel %vm133, %v131, %v132
  %vm135 = vcmp.eq.s32.totalorder %v122, %v134
  %136 = vset.pattern.permute.xlu0 4
  %137 = vperm.xlu0 %136, %v12
  %v138 = vpop.permute.xlu0 %137
  %v140 = vsel %vm135, %v138, 0.0
  %v141 = vsel %vm113, %v140, 0.0
  %v142 = vrot.slane %v141, 4
  %v143 = vadd.f32 %v141, %v142
  %v144 = vrot.slane %v143, 2
  %v145 = vadd.f32 %v143, %v144
  %v146 = vrot.slane %v145, 1
  %v147 = vadd.f32 %v145, %v146
  %v148 = vcvt.s32.f32 %v134
  %vm149 = vcmask 1040384
  %v150 = vsel %vm149, %v120, %v148
  %vm151 = vcmask 1041408
  %v152 = vsel %vm151, %v150, %v147
  %153 = vst [vmem:[%s2] sm:$0x7] %v152
  // Predicated region
  $region10: #{_proposal_target_impl.4} parent=0 // pred_check
    _
  $region11: #{_proposal_target_impl.4} parent=0 // pred_check_branch
    %155 = sbr.rel (0) target = $region13
  $region12: #{_proposal_target_impl.4} parent=0 // pred_region
    _
  $region13: #{_proposal_target_impl.4} parent=0 // pred_fallthru
    _
  // Predicated region
  $region14: #{_proposal_target_impl.4} parent=0 // pred_check
    _
  $region15: #{_proposal_target_impl.4} parent=0 // pred_check_branch
    %157 = sbr.rel (0) target = $region17
  $region16: #{_proposal_target_impl.4} parent=0 // pred_region
    _
  $region17: #{_proposal_target_impl.4} parent=0 // pred_fallthru
    _

// kernel: _proposal_target_impl.5
$region0: #{_proposal_target_impl.5}
  #allocation0 [shape = 'u32[]', space=smem, size = 0x4, offset = 0x4, fixed_abs, tag = 'smem constant byte address 0x4 - core index']
  #allocation1 [shape = 'u32[144,128]{1,0:T(1,128)}', space=vmem, size = 0x12000, scoped, tag = 'internal scratch']
  %s0 = inlined_call_operand.vmem [shape: f32[1,9,16], index: 0, kind: input, shape index: {}]
  %s1 = inlined_call_operand.vmem [shape: f32[1,12,16], index: 1, kind: output, shape index: {}]
  %s2 = sld [smem:[#allocation0]]
  $region14: #{_proposal_target_impl.5} parent=0
    _
  %s4 = ssub.s32 1, %s2
  %s5 = scalar_select 0, %s4, %s2
  // Predicated region
  $region2: #{_proposal_target_impl.5} parent=0 // pred_check
    _
  $region3: #{_proposal_target_impl.5} parent=0 // pred_check_branch
    %7 = sbr.rel (0) target = $region5
  $region4: #{_proposal_target_impl.5} parent=0 // pred_region
    _
  $region5: #{_proposal_target_impl.5} parent=0 // pred_fallthru
    _
  %v8 = vld [vmem:[%s0] sm:$0xff]
  %v9 = vld [vmem:[%s0 + $0x8] sm:$0x1]
  %v11 = vrot.slane %v8, 6
  %v13 = vsub.f32 %v8, %v11
  %v14 = vadd.f32 %v13, 1.0
  %v15 = vrcp.pop %v14
  %v16 = vmul.f32 %v14, 0.5
  %v18 = vrot.slane %v16, 2
  %v20 = vadd.f32 %v8, %v18
  %v22 = vrot.slane %v20, 4
  %v24 = vsub.f32 %v20, %v22
  %v26 = vrot.slane %v15, 6
  %v28 = vmul.f32 %v24, %v26
  %v29 = vrot.slane %v15, 4
  %v31 = vmul.f32 %v14, %v29
  %v32 = vlog2.pop %v31
  %v33 = vmul.f32 %v32, 0.6931472
  %v34 = vmul.f32 %v28, 10.0
  %v35 = vmul.f32 %v33, 5.0
  %vm36 = vcmp.gt.f32.partialorder %v9, 0.0
  %v38 = vrot.slane %v34, 4
  %v40 = vsel %vm36, %v38, 0.0
  %v41 = vrot.slane %v34, 5
  %v43 = vsel %vm36, %v41, 0.0
  %v45 = vrot.slane %v35, 6
  %v47 = vsel %vm36, %v45, 0.0
  %v48 = vrot.slane %v35, 7
  %v50 = vsel %vm36, %v48, 0.0
  %v52 = vrot.slane %v43, 7
  %v55 = vrot.slane %v47, 6
  %v58 = vrot.slane %v50, 5
  %vm60 = vcmask 1040384
  %v61 = vsel %vm60, %v40, %v52
  %vm62 = vcmask 1041408
  %v63 = vsel %vm62, %v61, %v55
  %vm64 = vcmask 1042432
  %v65 = vsel %vm64, %v63, %v58
  %v66 = vsel %vm36, 1.0, 0.0
  %v68 = vrot.slane %v66, 7
  %v70 = vrot.slane %v66, 6
  %v72 = vrot.slane %v66, 5
  %v74 = vsel %vm60, %v66, %v68
  %v75 = vsel %vm62, %v74, %v70
  %v76 = vsel %vm64, %v75, %v72
  %vm77 = vcmp.gt.f32.partialorder %v76, 0.0
  %v78 = vsel %vm77, 1, 0
  %v79 = vcvt.s32.f32 %v78
  %v81 = vrot.slane %v76, 4
  %vm83 = vcmask 1043456
  %v84 = vsel %vm83, %v65, %v81
  %vm85 = vcmask 130048
  %86 = vst.msk [vmem:[%s1] sm:$0xff] %vm85, %v84
  %vm87 = vcmask 125952
  %88 = vst.msk [vmem:[%s1 + $0x8] sm:$0xf] %vm87, %v79
  // Predicated region
  $region6: #{_proposal_target_impl.5} parent=0 // pred_check
    _
  $region7: #{_proposal_target_impl.5} parent=0 // pred_check_branch
    %90 = sbr.rel (0) target = $region9
  $region8: #{_proposal_target_impl.5} parent=0 // pred_region
    _
  $region9: #{_proposal_target_impl.5} parent=0 // pred_fallthru
    _
  // Predicated region
  $region10: #{_proposal_target_impl.5} parent=0 // pred_check
    _
  $region11: #{_proposal_target_impl.5} parent=0 // pred_check_branch
    %92 = sbr.rel (0) target = $region13
  $region12: #{_proposal_target_impl.5} parent=0 // pred_region
    _
  $region13: #{_proposal_target_impl.5} parent=0 // pred_fallthru
    _

</llo_original>
